<compile_context>
chip_gen: v7x
topology: tpu7x:2x2x1
jax: 0.10.0
libtpu: 0.0.40
codegen_flags: <defaults>
</compile_context>

<pallas_src>
import jax
import jax.numpy as jnp
from jax.experimental import pallas as pl
from jax.experimental.pallas import tpu as pltpu


def _round_up(x, m):
    return ((x + m - 1) // m) * m


def _cdiv(a, b):
    return (a + b - 1) // b


def neumf_kernel(uidx_ref, iidx_ref, utab_ref, itab_ref, b1_ref, wpm_ref, bp_ref,
                 out_ref):
    """One batch tile; batch is laid out along the 128-lane axis.

    uidx_ref/iidx_ref : [1, 1, TB] int32  user / item ids for this tile
    utab_ref          : [Hp+Fp, U] f32    packed user table  [E_uMLP @ W1u ; E_uGMF]
    itab_ref          : [Hp+Fp, I] f32    packed item table  [E_iMLP @ W1i ; E_iGMF*wpg]
    b1_ref            : [Hp, 1]    f32    first MLP-layer bias (column)
    wpm_ref           : [Hp, 1]    f32    predict-layer weights, MLP half (column)
    bp_ref            : [1, 1]     f32    predict-layer bias (SMEM scalar)
    out_ref           : [1, 1, TB] f32    predictions (lane-dense row)
    """
    hp = wpm_ref.shape[0]
    n_user = utab_ref.shape[1]
    n_item = itab_ref.shape[1]
    tb = out_ref.shape[-1]

    uid = uidx_ref[0]          # [1, TB] int32
    iid = iidx_ref[0]          # [1, TB] int32

    # In-kernel gather: one-hot (VPU compare vs 2-D iota) @ resident table (MXU).
    oh_u = jnp.where(
        jax.lax.broadcasted_iota(jnp.int32, (n_user, tb), 0) == uid, 1.0, 0.0)
    oh_i = jnp.where(
        jax.lax.broadcasted_iota(jnp.int32, (n_item, tb), 0) == iid, 1.0, 0.0)

    u_rows = jnp.dot(utab_ref[...], oh_u, preferred_element_type=jnp.float32)  # [Hp+Fp, TB]
    i_rows = jnp.dot(itab_ref[...], oh_i, preferred_element_type=jnp.float32)  # [Hp+Fp, TB]

    # MLP branch: the first Linear was folded into the tables at pack time,
    # so only bias + ReLU remain.  Rows >= H are exactly zero (zero padding).
    h = jnp.maximum(u_rows[:hp, :] + i_rows[:hp, :] + b1_ref[...], 0.0)        # [Hp, TB]

    # predict layer: GMF weights already folded into the item GMF columns;
    # both halves reduce over sublanes -> naturally lane-dense [1, TB].
    mlp_part = jnp.sum(h * wpm_ref[...], axis=0, keepdims=True)                # [1, TB]
    gmf_part = jnp.sum(u_rows[hp:, :] * i_rows[hp:, :], axis=0, keepdims=True) # [1, TB]

    out_ref[0] = (gmf_part + mlp_part + bp_ref[0, 0]).astype(out_ref.dtype)


def pack_params(p):
    """One-time repack of the raw parameters into the kernel layout (exact folds)."""
    f = p["embed_user_GMF"].shape[1]
    h = p["mlp_b"].shape[0]
    fp = _round_up(f, 8)
    hp = _round_up(h, 8)
    hi = jax.lax.Precision.HIGHEST

    w1u = p["mlp_w"][:f, :]            # [F, H]
    w1i = p["mlp_w"][f:, :]            # [F, H]
    wpg = p["pred_w"][:f, 0]           # [F]
    wpm = p["pred_w"][f:, 0]           # [H]

    # Fold the first MLP Linear into the tables (concat-split is exact):
    #   concat(um, im) @ W1 == um @ W1[:F] + im @ W1[F:]
    u_proj = jnp.dot(p["embed_user_MLP"], w1u, precision=hi)   # [U, H]
    i_proj = jnp.dot(p["embed_item_MLP"], w1i, precision=hi)   # [I, H]
    u_gmf = p["embed_user_GMF"]                                # [U, F]
    i_gmf = p["embed_item_GMF"] * wpg[None, :]                 # [I, F]  (wp[:F] fold)

    def pad_cols(x, n):
        out = jnp.zeros((x.shape[0], n), jnp.float32)
        return out.at[:, : x.shape[1]].set(x)

    # Stored transposed ([features, rows]) so the batch lands on the lane axis.
    user_tab = jnp.concatenate([pad_cols(u_proj, hp), pad_cols(u_gmf, fp)], axis=1).T
    item_tab = jnp.concatenate([pad_cols(i_proj, hp), pad_cols(i_gmf, fp)], axis=1).T
    b1 = jnp.zeros((hp, 1), jnp.float32).at[:h, 0].set(p["mlp_b"])
    wpm_col = jnp.zeros((hp, 1), jnp.float32).at[:h, 0].set(wpm)
    bp = jnp.asarray(p["pred_b"], jnp.float32).reshape(1, 1)

    return dict(Hp=hp, Fp=fp,
                user_tab=jnp.asarray(user_tab, jnp.float32),
                item_tab=jnp.asarray(item_tab, jnp.float32),
                b1=b1, wpm=wpm_col, bp=bp)


def neumf_forward(kp, user, item, *, tile_b=2048):
    """user, item: integer id vectors of shape [B].  Returns [B] f32 predictions."""
    assert user.shape == item.shape and user.ndim == 1
    B = user.shape[0]
    user = user.astype(jnp.int32)
    item = item.astype(jnp.int32)

    utab, itab = kp["user_tab"], kp["item_tab"]
    hf = utab.shape[0]              # Hp + Fp
    hp = kp["Hp"]
    n_user = utab.shape[1]
    n_item = itab.shape[1]

    # Batch tiling: big lane-dense tiles amortize the ~0.35us/step overhead;
    # balanced tiles; for a large single-tile batch keep >=2 grid steps so the
    # "parallel" axis can be sharded across v7x's two TensorCores.
    b8 = _round_up(B, 8)
    nt = max(1, _cdiv(b8, tile_b))
    if nt == 1 and b8 >= 1024:
        nt = 2
    TB = _round_up(_cdiv(b8, nt), 8)
    B_pad = nt * TB

    if B_pad != B:
        pad = B_pad - B
        user = jnp.concatenate([user, jnp.zeros((pad,), jnp.int32)])
        item = jnp.concatenate([item, jnp.zeros((pad,), jnp.int32)])
    uidx = user.reshape(nt, 1, TB)      # lane-dense id blocks
    iidx = item.reshape(nt, 1, TB)

    grid_spec = pltpu.PrefetchScalarGridSpec(
        num_scalar_prefetch=0,
        grid=(nt,),
        in_specs=[
            pl.BlockSpec((1, 1, TB), lambda i: (i, 0, 0)),        # user ids (tiled)
            pl.BlockSpec((1, 1, TB), lambda i: (i, 0, 0)),        # item ids (tiled)
            pl.BlockSpec((hf, n_user), lambda i: (0, 0)),         # user table (resident)
            pl.BlockSpec((hf, n_item), lambda i: (0, 0)),         # item table (resident)
            pl.BlockSpec((hp, 1), lambda i: (0, 0)),              # b1 column (resident)
            pl.BlockSpec((hp, 1), lambda i: (0, 0)),              # wpm column (resident)
            pl.BlockSpec(memory_space=pltpu.MemorySpace.SMEM),    # bp scalar
        ],
        out_specs=pl.BlockSpec((1, 1, TB), lambda i: (i, 0, 0)),  # lane-dense output
    )

    out = pl.pallas_call(
        neumf_kernel,
        out_shape=jax.ShapeDtypeStruct((nt, 1, TB), jnp.float32),
        grid_spec=grid_spec,
        compiler_params=pltpu.CompilerParams(
            dimension_semantics=("parallel",),     # megacore-shardable batch axis
            vmem_limit_bytes=32 * 1024 * 1024,
        ),
    )(uidx, iidx, utab, itab, kp["b1"], kp["wpm"], kp["bp"])

    return out.reshape(-1)[:B]   # prediction.view(-1)


def init_params(key, user_num, item_num, factor_num, mlp_hidden):
    ks = jax.random.split(key, 8)
    std = 0.01
    return {
        "embed_user_GMF": std * jax.random.normal(ks[0], (user_num, factor_num), jnp.float32),
        "embed_item_GMF": std * jax.random.normal(ks[1], (item_num, factor_num), jnp.float32),
        "embed_user_MLP": std * jax.random.normal(ks[2], (user_num, factor_num), jnp.float32),
        "embed_item_MLP": std * jax.random.normal(ks[3], (item_num, factor_num), jnp.float32),
        # MLP_layers: single Linear(2F -> H) + ReLU
        "mlp_w": 0.1 * jax.random.normal(ks[4], (2 * factor_num, mlp_hidden), jnp.float32),
        "mlp_b": 0.1 * jax.random.normal(ks[5], (mlp_hidden,), jnp.float32),
        # predict_layer: Linear(F + H -> 1)
        "pred_w": 0.1 * jax.random.normal(ks[6], (factor_num + mlp_hidden, 1), jnp.float32),
        "pred_b": 0.1 * jax.random.normal(ks[7], (1,), jnp.float32),
    }


if __name__ == "__main__":
    key = jax.random.PRNGKey(0)
    user_num, item_num, factor_num, mlp_hidden = 32, 48, 32, 16
    B = 8

    pkey, ukey, ikey = jax.random.split(key, 3)
    params = init_params(pkey, user_num, item_num, factor_num, mlp_hidden)
    kparams = pack_params(params)
    user = jax.random.randint(ukey, (B,), 0, user_num, dtype=jnp.int32)
    item = jax.random.randint(ikey, (B,), 0, item_num, dtype=jnp.int32)

    pred = neumf_forward(kparams, user, item)
    jax.block_until_ready(pred)

    # Pure-JAX reference check (same math on the raw, un-packed parameters).
    hi = jax.lax.Precision.HIGHEST
    ug = params["embed_user_GMF"][user]; ig = params["embed_item_GMF"][item]
    um = params["embed_user_MLP"][user]; im = params["embed_item_MLP"][item]
    gmf = ug * ig
    h = jnp.maximum(jnp.dot(jnp.concatenate([um, im], -1), params["mlp_w"], precision=hi)
                    + params["mlp_b"], 0.0)
    ref = (jnp.dot(jnp.concatenate([gmf, h], -1), params["pred_w"], precision=hi)
           + params["pred_b"]).reshape(-1)

    assert pred.shape == (B,)
    # Slightly looser than 1e-5: the in-kernel f32 MXU path may round differently
    # from the XLA HIGHEST-precision reference matmuls.
    assert jnp.allclose(pred, ref, atol=1e-4, rtol=1e-4), (pred, ref)

    print("KERNEL_OK")
</pallas_src>

<mosaic_0001>
module attributes {stable_mosaic.version = 11 : i64} {
  func.func @neumf_kernel(%arg0: i32, %arg1: memref<1x1x8xi32, #tpu.memory_space<vmem>>, %arg2: memref<1x1x8xi32, #tpu.memory_space<vmem>>, %arg3: memref<48x32xf32, #tpu.memory_space<vmem>>, %arg4: memref<48x48xf32, #tpu.memory_space<vmem>>, %arg5: memref<16x1xf32, #tpu.memory_space<vmem>>, %arg6: memref<16x1xf32, #tpu.memory_space<vmem>>, %arg7: memref<1x1xf32, #tpu.memory_space<smem>>, %arg8: memref<1x1x8xf32, #tpu.memory_space<vmem>>) attributes {dimension_semantics = [#tpu.dimension_semantics<parallel>], iteration_bounds = array<i64: 1>, scalar_prefetch = 0 : i64, scratch_operands = 0 : i64, tpu.core_type = #tpu.core_type<tc>, window_params = [{transform_indices = @transform_0, window_bounds = array<i64: 1, 1, 8>}, {transform_indices = @transform_1, window_bounds = array<i64: 1, 1, 8>}, {pipeline_mode = #tpu.pipeline_mode<synchronous>, transform_indices = @transform_2, window_bounds = array<i64: 48, 32>}, {pipeline_mode = #tpu.pipeline_mode<synchronous>, transform_indices = @transform_3, window_bounds = array<i64: 48, 48>}, {pipeline_mode = #tpu.pipeline_mode<synchronous>, transform_indices = @transform_4, window_bounds = array<i64: 16, 1>}, {pipeline_mode = #tpu.pipeline_mode<synchronous>, transform_indices = @transform_5, window_bounds = array<i64: 16, 1>}, {transform_indices = @transform_6, window_bounds = array<i64: 1, 1>}, {transform_indices = @transform_7, window_bounds = array<i64: 1, 1, 8>}]} {
    %c0 = arith.constant 0 : index
    %c0_0 = arith.constant 0 : index
    %c0_1 = arith.constant 0 : index
    %0 = vector.load %arg1[%c0, %c0_0, %c0_1] : memref<1x1x8xi32, #tpu.memory_space<vmem>>, vector<1x1x8xi32>
    %1 = vector.shape_cast %0 : vector<1x1x8xi32> to vector<1x8xi32>
    %c0_2 = arith.constant 0 : index
    %c0_3 = arith.constant 0 : index
    %c0_4 = arith.constant 0 : index
    %2 = vector.load %arg2[%c0_2, %c0_3, %c0_4] : memref<1x1x8xi32, #tpu.memory_space<vmem>>, vector<1x1x8xi32>
    %3 = vector.shape_cast %2 : vector<1x1x8xi32> to vector<1x8xi32>
    %4 = tpu.iota {dimensions = array<i32: 0>} : vector<32x8xi32>
    %5 = vector.broadcast %1 : vector<1x8xi32> to vector<32x8xi32>
    %6 = arith.cmpi eq, %4, %5 : vector<32x8xi32>
    %cst = arith.constant 1.000000e+00 : f32
    %cst_5 = arith.constant 0.000000e+00 : f32
    %7 = vector.broadcast %cst : f32 to vector<32x8xf32>
    %8 = vector.broadcast %cst_5 : f32 to vector<32x8xf32>
    %9 = arith.select %6, %7, %8 : vector<32x8xi1>, vector<32x8xf32>
    %10 = tpu.iota {dimensions = array<i32: 0>} : vector<48x8xi32>
    %11 = vector.broadcast %3 : vector<1x8xi32> to vector<48x8xi32>
    %12 = arith.cmpi eq, %10, %11 : vector<48x8xi32>
    %cst_6 = arith.constant 1.000000e+00 : f32
    %cst_7 = arith.constant 0.000000e+00 : f32
    %13 = vector.broadcast %cst_6 : f32 to vector<48x8xf32>
    %14 = vector.broadcast %cst_7 : f32 to vector<48x8xf32>
    %15 = arith.select %12, %13, %14 : vector<48x8xi1>, vector<48x8xf32>
    %c0_8 = arith.constant 0 : index
    %c0_9 = arith.constant 0 : index
    %16 = vector.load %arg3[%c0_8, %c0_9] : memref<48x32xf32, #tpu.memory_space<vmem>>, vector<48x32xf32>
    %cst_10 = arith.constant dense<0.000000e+00> : vector<48x8xf32>
    %17 = tpu.matmul %16, %9, %cst_10 {dimension_numbers = #tpu.dot_dimension_numbers<[1], [0], [0], [1], [0, 0, 1, 1], [], []>} : vector<48x32xf32>, vector<32x8xf32>, vector<48x8xf32> -> vector<48x8xf32>
    %c0_11 = arith.constant 0 : index
    %c0_12 = arith.constant 0 : index
    %18 = vector.load %arg4[%c0_11, %c0_12] : memref<48x48xf32, #tpu.memory_space<vmem>>, vector<48x48xf32>
    %cst_13 = arith.constant dense<0.000000e+00> : vector<48x8xf32>
    %19 = tpu.matmul %18, %15, %cst_13 {dimension_numbers = #tpu.dot_dimension_numbers<[1], [0], [0], [1], [0, 0, 1, 1], [], []>} : vector<48x48xf32>, vector<48x8xf32>, vector<48x8xf32> -> vector<48x8xf32>
    %20 = vector.extract_strided_slice %17 {offsets = [0, 0], sizes = [16, 8], strides = [1, 1]} : vector<48x8xf32> to vector<16x8xf32>
    %21 = vector.extract_strided_slice %19 {offsets = [0, 0], sizes = [16, 8], strides = [1, 1]} : vector<48x8xf32> to vector<16x8xf32>
    %22 = arith.addf %20, %21 : vector<16x8xf32>
    %c0_14 = arith.constant 0 : index
    %c0_15 = arith.constant 0 : index
    %23 = vector.load %arg5[%c0_14, %c0_15] : memref<16x1xf32, #tpu.memory_space<vmem>>, vector<16x1xf32>
    %24 = vector.broadcast %23 : vector<16x1xf32> to vector<16x8xf32>
    %25 = arith.addf %22, %24 : vector<16x8xf32>
    %cst_16 = arith.constant 0.000000e+00 : f32
    %26 = vector.broadcast %cst_16 : f32 to vector<16x8xf32>
    %27 = arith.maximumf %25, %26 : vector<16x8xf32>
    %c0_17 = arith.constant 0 : index
    %c0_18 = arith.constant 0 : index
    %28 = vector.load %arg6[%c0_17, %c0_18] : memref<16x1xf32, #tpu.memory_space<vmem>>, vector<16x1xf32>
    %29 = vector.broadcast %28 : vector<16x1xf32> to vector<16x8xf32>
    %30 = arith.mulf %27, %29 : vector<16x8xf32>
    %cst_19 = arith.constant dense<0.000000e+00> : vector<8xf32>
    %31 = vector.multi_reduction <add>, %30, %cst_19 [0] : vector<16x8xf32> to vector<8xf32>
    %32 = vector.shape_cast %31 : vector<8xf32> to vector<1x8xf32>
    %33 = vector.extract_strided_slice %17 {offsets = [16, 0], sizes = [32, 8], strides = [1, 1]} : vector<48x8xf32> to vector<32x8xf32>
    %34 = vector.extract_strided_slice %19 {offsets = [16, 0], sizes = [32, 8], strides = [1, 1]} : vector<48x8xf32> to vector<32x8xf32>
    %35 = arith.mulf %33, %34 : vector<32x8xf32>
    %cst_20 = arith.constant dense<0.000000e+00> : vector<8xf32>
    %36 = vector.multi_reduction <add>, %35, %cst_20 [0] : vector<32x8xf32> to vector<8xf32>
    %37 = vector.shape_cast %36 : vector<8xf32> to vector<1x8xf32>
    %38 = arith.addf %37, %32 : vector<1x8xf32>
    %c0_21 = arith.constant 0 : index
    %c0_22 = arith.constant 0 : index
    %39 = memref.load %arg7[%c0_21, %c0_22] : memref<1x1xf32, #tpu.memory_space<smem>>
    %40 = vector.broadcast %39 : f32 to vector<1x8xf32>
    %41 = arith.addf %38, %40 : vector<1x8xf32>
    %c0_23 = arith.constant 0 : index
    %c0_24 = arith.constant 0 : index
    %c0_25 = arith.constant 0 : index
    %42 = vector.load %arg8[%c0_23, %c0_24, %c0_25] : memref<1x1x8xf32, #tpu.memory_space<vmem>>, vector<1x1x8xf32>
    %43 = vector.shape_cast %42 : vector<1x1x8xf32> to vector<1x8xf32>
    %44 = vector.shape_cast %41 : vector<1x8xf32> to vector<1x1x8xf32>
    tpu.vector_store %arg8[%c0_23, %c0_24, %c0_25], %44 {strides = array<i32>} : memref<1x1x8xf32, #tpu.memory_space<vmem>>, vector<1x1x8xf32>,
    return
  }
  func.func @transform_0(%arg0: i32) -> (i32, i32, i32) {
    %c0_i32 = arith.constant 0 : i32
    %c0_i32_0 = arith.constant 0 : i32
    %c0_i32_1 = arith.constant 0 : i32
    return %arg0, %c0_i32, %c0_i32_0 : i32, i32, i32
  }
  func.func @transform_1(%arg0: i32) -> (i32, i32, i32) {
    %c0_i32 = arith.constant 0 : i32
    %c0_i32_0 = arith.constant 0 : i32
    %c0_i32_1 = arith.constant 0 : i32
    return %arg0, %c0_i32, %c0_i32_0 : i32, i32, i32
  }
  func.func @transform_2(%arg0: i32) -> (i32, i32) {
    %c0_i32 = arith.constant 0 : i32
    %c0_i32_0 = arith.constant 0 : i32
    %c0_i32_1 = arith.constant 0 : i32
    return %c0_i32, %c0_i32_0 : i32, i32
  }
  func.func @transform_3(%arg0: i32) -> (i32, i32) {
    %c0_i32 = arith.constant 0 : i32
    %c0_i32_0 = arith.constant 0 : i32
    %c0_i32_1 = arith.constant 0 : i32
    return %c0_i32, %c0_i32_0 : i32, i32
  }
  func.func @transform_4(%arg0: i32) -> (i32, i32) {
    %c0_i32 = arith.constant 0 : i32
    %c0_i32_0 = arith.constant 0 : i32
    %c0_i32_1 = arith.constant 0 : i32
    return %c0_i32, %c0_i32_0 : i32, i32
  }
  func.func @transform_5(%arg0: i32) -> (i32, i32) {
    %c0_i32 = arith.constant 0 : i32
    %c0_i32_0 = arith.constant 0 : i32
    %c0_i32_1 = arith.constant 0 : i32
    return %c0_i32, %c0_i32_0 : i32, i32
  }
  func.func @transform_6(%arg0: i32) -> (i32, i32) {
    %c0_i32 = arith.constant 0 : i32
    %c0_i32_0 = arith.constant 0 : i32
    %c0_i32_1 = arith.constant 0 : i32
    return %c0_i32, %c0_i32_0 : i32, i32
  }
  func.func @transform_7(%arg0: i32) -> (i32, i32, i32) {
    %c0_i32 = arith.constant 0 : i32
    %c0_i32_0 = arith.constant 0 : i32
    %c0_i32_1 = arith.constant 0 : i32
    return %arg0, %c0_i32, %c0_i32_0 : i32, i32, i32
  }
}

</mosaic_0001>

<llo_original>
// kernel: tpu_custom_call.1
$region0: #{tpu_custom_call.1}
  #allocation0 [shape = 'u32[]', space=smem, size = 0x4, offset = 0x4, fixed_abs, tag = 'smem constant byte address 0x4 - core index']
  #allocation1 [shape = 'u32[144,128]{1,0:T(1,128)}', space=vmem, size = 0x12000, scoped, tag = 'internal scratch']
  #allocation2 [shape = 'f32[1,1]{1,0:T(1,128)S(6)}', space=smem, size = 0x200, scoped, tag = 'scoped memory for tpu_custom_call.1']
  %s0 = inlined_call_operand.vmem [shape: s32[1,1,8], index: 0, kind: input, shape index: {}]
  %s1 = inlined_call_operand.vmem [shape: s32[1,1,8], index: 1, kind: input, shape index: {}]
  %s2 = inlined_call_operand.vmem [shape: f32[48,32], index: 2, kind: input, shape index: {}]
  %s3 = inlined_call_operand.vmem [shape: f32[48,48], index: 3, kind: input, shape index: {}]
  %s4 = inlined_call_operand.vmem [shape: f32[16,1], index: 4, kind: input, shape index: {}]
  %s5 = inlined_call_operand.vmem [shape: f32[16,1], index: 5, kind: input, shape index: {}]
  %s6 = inlined_call_operand.<no memory space> [shape: f32[1,1], index: 6, kind: input, shape index: {}]
  %s7 = inlined_call_operand.hbm [shape: f32[1,1,8], index: 7, kind: output, shape index: {}]
  %s8 = sld [smem:[#allocation0]]
  $region38: #{tpu_custom_call.1} parent=0
    _
  %s10 = ssub.s32 1, %s8
  %s11 = scalar_select 0, %s10, %s8
  %12 = sst [smem:[#allocation2]] %s6
  $region1: #{tpu_custom_call.1} parent=0
    #allocation3 [shape = 'u8[512]{0}', space=vmem, size = 0x400, scoped, tag = 'output window, operand 0, single buffered']
    #allocation4 [shape = 's32[1]{0}', space=sflag, size = 0x4, scoped, tag = 'scoped memory for tpu_custom_call.1']
    %13 = vsyncpa [#allocation4], 0
    // Predicated region
    $region2: #{tpu_custom_call.1} parent=1 // pred_check
      _
    $region3: #{tpu_custom_call.1} parent=1 // pred_check_branch
      %15 = sbr.rel (0) target = $region5
    $region4: #{tpu_custom_call.1} parent=1 // pred_region
      _
    $region5: #{tpu_custom_call.1} parent=1 // pred_fallthru
      _
    // Predicated region
    $region6: #{tpu_custom_call.1} parent=1 // pred_check
      _
    $region7: #{tpu_custom_call.1} parent=1 // pred_check_branch
      %17 = sbr.rel (0) target = $region9
    $region8: #{tpu_custom_call.1} parent=1 // pred_region
      _
    $region9: #{tpu_custom_call.1} parent=1 // pred_fallthru
      _
    // Predicated region
    $region10: #{tpu_custom_call.1} parent=1 // pred_check
      _
    $region11: #{tpu_custom_call.1} parent=1 // pred_check_branch
      %19 = sbr.rel (0) target = $region13
    $region12: #{tpu_custom_call.1} parent=1 // pred_region
      _
    $region13: #{tpu_custom_call.1} parent=1 // pred_fallthru
      _
    // Predicated region
    $region14: #{tpu_custom_call.1} parent=1 // pred_check
      _
    $region15: #{tpu_custom_call.1} parent=1 // pred_check_branch
      %21 = sbr.rel (0) target = $region17
    $region16: #{tpu_custom_call.1} parent=1 // pred_region
      _
    $region17: #{tpu_custom_call.1} parent=1 // pred_fallthru
      _
    // Predicated region
    $region18: #{tpu_custom_call.1} parent=1 // pred_check
      _
    $region19: #{tpu_custom_call.1} parent=1 // pred_check_branch
      %23 = sbr.rel (0) target = $region21
    $region20: #{tpu_custom_call.1} parent=1 // pred_region
      _
    $region21: #{tpu_custom_call.1} parent=1 // pred_fallthru
      _
    // Predicated region
    $region22: #{tpu_custom_call.1} parent=1 // pred_check
      _
    $region23: #{tpu_custom_call.1} parent=1 // pred_check_branch
      %25 = sbr.rel (0) target = $region25
    $region24: #{tpu_custom_call.1} parent=1 // pred_region
      _
    $region25: #{tpu_custom_call.1} parent=1 // pred_fallthru
      _
    // Predicated region
    $region26: #{tpu_custom_call.1} parent=1 // pred_check
      _
    $region27: #{tpu_custom_call.1} parent=1 // pred_check_branch
      %27 = sbr.rel (0) target = $region29
    $region28: #{tpu_custom_call.1} parent=1 // pred_region
      _
    $region29: #{tpu_custom_call.1} parent=1 // pred_fallthru
      _
    %v28 = vld [vmem:[%s0] sm:$0x1]
    %v29 = vld [vmem:[%s1] sm:$0x1]
    %v30 = vlaneseq
    %v31 = vshrl.u32 %v30, 7
    %v32 = vadd.s32 %v31, 8
    %v33 = vadd.s32 %v31, 16
    %v34 = vadd.s32 %v31, 24
    %v35 = vlaneseq
    %v36 = vshrl.u32 %v35, 7
    %v37 = vsub.s32 0, %v36
    %v38 = vrot.slane %v28, %v37
    %vm39 = vcmp.eq.s32.totalorder %v31, %v38
    %vm40 = vcmp.eq.s32.totalorder %v32, %v38
    %vm41 = vcmp.eq.s32.totalorder %v33, %v38
    %vm42 = vcmp.eq.s32.totalorder %v34, %v38
    %v43 = vsel %vm39, 1.0, 0.0
    %v44 = vsel %vm40, 1.0, 0.0
    %v45 = vsel %vm41, 1.0, 0.0
    %v46 = vsel %vm42, 1.0, 0.0
    %v47 = vadd.s32 %v31, 32
    %v48 = vadd.s32 %v31, 40
    %v49 = vlaneseq
    %v50 = vshrl.u32 %v49, 7
    %v51 = vsub.s32 0, %v50
    %v52 = vrot.slane %v29, %v51
    %vm53 = vcmp.eq.s32.totalorder %v31, %v52
    %vm54 = vcmp.eq.s32.totalorder %v32, %v52
    %vm55 = vcmp.eq.s32.totalorder %v33, %v52
    %vm56 = vcmp.eq.s32.totalorder %v34, %v52
    %vm57 = vcmp.eq.s32.totalorder %v47, %v52
    %vm58 = vcmp.eq.s32.totalorder %v48, %v52
    %v59 = vsel %vm53, 1.0, 0.0
    %v60 = vsel %vm54, 1.0, 0.0
    %v61 = vsel %vm55, 1.0, 0.0
    %v62 = vsel %vm56, 1.0, 0.0
    %v63 = vsel %vm57, 1.0, 0.0
    %v64 = vsel %vm58, 1.0, 0.0
    %v65 = vld [vmem:[%s2] sm:$0xff]
    %v66 = vld [vmem:[%s2 + $0x8] sm:$0xff]
    %v67 = vld [vmem:[%s2 + $0x10] sm:$0xff]
    %v68 = vld [vmem:[%s2 + $0x18] sm:$0xff]
    %v69 = vld [vmem:[%s2 + $0x20] sm:$0xff]
    %v70 = vld [vmem:[%s2 + $0x28] sm:$0xff]
    %vm71 = vcmask 261120
    %v73 = vsel %vm71, %v65, 0
    %v76 = vsel %vm71, %v66, 0
    %v79 = vsel %vm71, %v67, 0
    %v82 = vsel %vm71, %v68, 0
    %v85 = vsel %vm71, %v69, 0
    %v88 = vsel %vm71, %v70, 0
    %90 = vmatprep.subr.mxu0 0.0
    %91 = vmatpush1.msra.mxu0 %v43
    %92 = vmatprep.subr.mxu0 0.0
    %93 = vmatpush1.msra.mxu0 %v44
    %94 = vmatprep.subr.mxu0 0.0
    %95 = vmatpush1.msra.mxu0 %v45
    %96 = vmatprep.subr.mxu0 0.0
    %97 = vmatpush1.msra.mxu0 %v46
    %98 = vmatprep.subr.mxu0 0.0
    %99 = vmatpush1.msra.mxu0 0.0
    %100 = vmatprep.subr.mxu0 0.0
    %101 = vmatpush1.msra.mxu0 0.0
    %102 = vmatprep.subr.mxu0 0.0
    %103 = vmatpush1.msra.mxu0 0.0
    %104 = vmatprep.subr.mxu0 0.0
    %105 = vmatpush1.msra.mxu0 0.0
    %106 = vmatprep.subr.mxu0 0.0
    %107 = vmatpush1.msra.mxu0 0.0
    %108 = vmatprep.subr.mxu0 0.0
    %109 = vmatpush1.msra.mxu0 0.0
    %110 = vmatprep.subr.mxu0 0.0
    %111 = vmatpush1.msra.mxu0 0.0
    %112 = vmatprep.subr.mxu0 0.0
    %113 = vmatpush1.msra.mxu0 0.0
    %114 = vmatprep.subr.mxu0 0.0
    %115 = vmatpush1.msra.mxu0 0.0
    %116 = vmatprep.subr.mxu0 0.0
    %117 = vmatpush1.msra.mxu0 0.0
    %118 = vmatprep.subr.mxu0 0.0
    %119 = vmatpush1.msra.mxu0 0.0
    %120 = vmatprep.subr.mxu0 0.0
    %121 = vmatpush1.msra.mxu0 0.0
    %122 = vmatprep.subr.mxu0 0.0
    %123 = vmatpush1.msra.mxu0 0.0
    %124 = vmatprep.subr.mxu0 0.0
    %125 = vmatpush1.msra.mxu0 0.0
    %126 = vmatprep.subr.mxu0 0.0
    %127 = vmatpush1.msra.mxu0 0.0
    %128 = vmatprep.subr.mxu0 0.0
    %129 = vmatpush1.msra.mxu0 0.0
    %130 = vmatprep.subr.mxu0 0.0
    %131 = vmatpush1.msra.mxu0 0.0
    %132 = vmatprep.subr.mxu0 0.0
    %133 = vmatpush1.msra.mxu0 0.0
    %134 = vmatprep.subr.mxu0 0.0
    %135 = vmatpush1.msra.mxu0 0.0
    %136 = vmatprep.subr.mxu0 0.0
    %137 = vmatpush1.msra.mxu0 0.0
    %138 = vmatprep.subr.mxu0 0.0
    %139 = vmatpush1.msra.mxu0 0.0
    %140 = vmatprep.subr.mxu0 0.0
    %141 = vmatpush1.msra.mxu0 0.0
    %142 = vmatprep.subr.mxu0 0.0
    %143 = vmatpush1.msra.mxu0 0.0
    %144 = vmatprep.subr.mxu0 0.0
    %145 = vmatpush1.msra.mxu0 0.0
    %146 = vmatprep.subr.mxu0 0.0
    %147 = vmatpush1.msra.mxu0 0.0
    %148 = vmatprep.subr.mxu0 0.0
    %149 = vmatpush1.msra.mxu0 0.0
    %150 = vmatprep.subr.mxu0 0.0
    %151 = vmatpush1.msra.mxu0 0.0
    %152 = vmatprep.subr.mxu0 0.0
    %153 = vmatpush1.msra.mxu0 0.0
    %154 = vmatprep.mubr.f32.mxu0 0.0
    %155 = vmatmul.mubr.f32.gmra.mrb[0].mxu0 %v73
    %v156 = vpop.f32.mrb[0].mxu0
    %v157 = vadd.f32 0.0, %v156
    %v158 = vpop.f32.mrb[0].mxu0
    %159 = vmatprep.mubr.f32.mxu0 0.0
    %160 = vmatmul.mubr.f32.gmra.mrb[0].mxu0 %v76
    %v161 = vpop.f32.mrb[0].mxu0
    %v162 = vadd.f32 0.0, %v161
    %v163 = vpop.f32.mrb[0].mxu0
    %164 = vmatprep.mubr.f32.mxu0 0.0
    %165 = vmatmul.mubr.f32.gmra.mrb[0].mxu0 %v79
    %v166 = vpop.f32.mrb[0].mxu0
    %v167 = vadd.f32 0.0, %v166
    %v168 = vpop.f32.mrb[0].mxu0
    %169 = vmatprep.mubr.f32.mxu0 0.0
    %170 = vmatmul.mubr.f32.gmra.mrb[0].mxu0 %v82
    %v171 = vpop.f32.mrb[0].mxu0
    %v172 = vadd.f32 0.0, %v171
    %v173 = vpop.f32.mrb[0].mxu0
    %174 = vmatprep.mubr.f32.mxu0 0.0
    %175 = vmatmul.mubr.f32.gmra.mrb[0].mxu0 %v85
    %v176 = vpop.f32.mrb[0].mxu0
    %v177 = vadd.f32 0.0, %v176
    %v178 = vpop.f32.mrb[0].mxu0
    %179 = vmatprep.mubr.f32.mxu0 0.0
    %180 = vmatmul.mubr.f32.gmra.mrb[0].mxu0 %v88
    %v181 = vpop.f32.mrb[0].mxu0
    %v182 = vadd.f32 0.0, %v181
    %v183 = vpop.f32.mrb[0].mxu0
    %184 = vdwg.mxu0
    %v185 = vld [vmem:[%s3] sm:$0xff]
    %v186 = vld [vmem:[%s3 + $0x8] sm:$0xff]
    %v187 = vld [vmem:[%s3 + $0x10] sm:$0xff]
    %v188 = vld [vmem:[%s3 + $0x18] sm:$0xff]
    %v189 = vld [vmem:[%s3 + $0x20] sm:$0xff]
    %v190 = vld [vmem:[%s3 + $0x28] sm:$0xff]
    %vm191 = vcmask 392192
    %v193 = vsel %vm191, %v185, 0
    %v196 = vsel %vm191, %v186, 0
    %v199 = vsel %vm191, %v187, 0
    %v202 = vsel %vm191, %v188, 0
    %v205 = vsel %vm191, %v189, 0
    %v208 = vsel %vm191, %v190, 0
    %210 = vmatprep.subr.mxu0 0.0
    %211 = vmatpush1.msra.mxu0 %v59
    %212 = vmatprep.subr.mxu0 0.0
    %213 = vmatpush1.msra.mxu0 %v60
    %214 = vmatprep.subr.mxu0 0.0
    %215 = vmatpush1.msra.mxu0 %v61
    %216 = vmatprep.subr.mxu0 0.0
    %217 = vmatpush1.msra.mxu0 %v62
    %218 = vmatprep.subr.mxu0 0.0
    %219 = vmatpush1.msra.mxu0 %v63
    %220 = vmatprep.subr.mxu0 0.0
    %221 = vmatpush1.msra.mxu0 %v64
    %222 = vmatprep.subr.mxu0 0.0
    %223 = vmatpush1.msra.mxu0 0.0
    %224 = vmatprep.subr.mxu0 0.0
    %225 = vmatpush1.msra.mxu0 0.0
    %226 = vmatprep.subr.mxu0 0.0
    %227 = vmatpush1.msra.mxu0 0.0
    %228 = vmatprep.subr.mxu0 0.0
    %229 = vmatpush1.msra.mxu0 0.0
    %230 = vmatprep.subr.mxu0 0.0
    %231 = vmatpush1.msra.mxu0 0.0
    %232 = vmatprep.subr.mxu0 0.0
    %233 = vmatpush1.msra.mxu0 0.0
    %234 = vmatprep.subr.mxu0 0.0
    %235 = vmatpush1.msra.mxu0 0.0
    %236 = vmatprep.subr.mxu0 0.0
    %237 = vmatpush1.msra.mxu0 0.0
    %238 = vmatprep.subr.mxu0 0.0
    %239 = vmatpush1.msra.mxu0 0.0
    %240 = vmatprep.subr.mxu0 0.0
    %241 = vmatpush1.msra.mxu0 0.0
    %242 = vmatprep.subr.mxu0 0.0
    %243 = vmatpush1.msra.mxu0 0.0
    %244 = vmatprep.subr.mxu0 0.0
    %245 = vmatpush1.msra.mxu0 0.0
    %246 = vmatprep.subr.mxu0 0.0
    %247 = vmatpush1.msra.mxu0 0.0
    %248 = vmatprep.subr.mxu0 0.0
    %249 = vmatpush1.msra.mxu0 0.0
    %250 = vmatprep.subr.mxu0 0.0
    %251 = vmatpush1.msra.mxu0 0.0
    %252 = vmatprep.subr.mxu0 0.0
    %253 = vmatpush1.msra.mxu0 0.0
    %254 = vmatprep.subr.mxu0 0.0
    %255 = vmatpush1.msra.mxu0 0.0
    %256 = vmatprep.subr.mxu0 0.0
    %257 = vmatpush1.msra.mxu0 0.0
    %258 = vmatprep.subr.mxu0 0.0
    %259 = vmatpush1.msra.mxu0 0.0
    %260 = vmatprep.subr.mxu0 0.0
    %261 = vmatpush1.msra.mxu0 0.0
    %262 = vmatprep.subr.mxu0 0.0
    %263 = vmatpush1.msra.mxu0 0.0
    %264 = vmatprep.subr.mxu0 0.0
    %265 = vmatpush1.msra.mxu0 0.0
    %266 = vmatprep.subr.mxu0 0.0
    %267 = vmatpush1.msra.mxu0 0.0
    %268 = vmatprep.subr.mxu0 0.0
    %269 = vmatpush1.msra.mxu0 0.0
    %270 = vmatprep.subr.mxu0 0.0
    %271 = vmatpush1.msra.mxu0 0.0
    %272 = vmatprep.subr.mxu0 0.0
    %273 = vmatpush1.msra.mxu0 0.0
    %274 = vmatprep.mubr.f32.mxu0 0.0
    %275 = vmatmul.mubr.f32.gmra.mrb[0].mxu0 %v193
    %v276 = vpop.f32.mrb[0].mxu0
    %v277 = vadd.f32 0.0, %v276
    %v278 = vpop.f32.mrb[0].mxu0
    %279 = vmatprep.mubr.f32.mxu0 0.0
    %280 = vmatmul.mubr.f32.gmra.mrb[0].mxu0 %v196
    %v281 = vpop.f32.mrb[0].mxu0
    %v282 = vadd.f32 0.0, %v281
    %v283 = vpop.f32.mrb[0].mxu0
    %284 = vmatprep.mubr.f32.mxu0 0.0
    %285 = vmatmul.mubr.f32.gmra.mrb[0].mxu0 %v199
    %v286 = vpop.f32.mrb[0].mxu0
    %v287 = vadd.f32 0.0, %v286
    %v288 = vpop.f32.mrb[0].mxu0
    %289 = vmatprep.mubr.f32.mxu0 0.0
    %290 = vmatmul.mubr.f32.gmra.mrb[0].mxu0 %v202
    %v291 = vpop.f32.mrb[0].mxu0
    %v292 = vadd.f32 0.0, %v291
    %v293 = vpop.f32.mrb[0].mxu0
    %294 = vmatprep.mubr.f32.mxu0 0.0
    %295 = vmatmul.mubr.f32.gmra.mrb[0].mxu0 %v205
    %v296 = vpop.f32.mrb[0].mxu0
    %v297 = vadd.f32 0.0, %v296
    %v298 = vpop.f32.mrb[0].mxu0
    %299 = vmatprep.mubr.f32.mxu0 0.0
    %300 = vmatmul.mubr.f32.gmra.mrb[0].mxu0 %v208
    %v301 = vpop.f32.mrb[0].mxu0
    %v302 = vadd.f32 0.0, %v301
    %v303 = vpop.f32.mrb[0].mxu0
    %304 = vdwg.mxu0
    %v305 = vadd.f32 %v157, %v277
    %v306 = vadd.f32 %v162, %v282
    %v307 = vld [vmem:[%s4] sm:$0xff]
    %v308 = vld [vmem:[%s4 + $0x8] sm:$0xff]
    %310 = vset.pattern.permute.xlu0 0
    %311 = vperm.xlu0 %310, %v307
    %v312 = vpop.permute.xlu0 %311
    %315 = vset.pattern.permute.xlu0 0
    %316 = vperm.xlu0 %315, %v308
    %v317 = vpop.permute.xlu0 %316
    %v319 = vadd.f32 %v305, %v312
    %v320 = vadd.f32 %v306, %v317
    %v321 = vmax.f32 %v319, 0.0
    %v322 = vmax.f32 %v320, 0.0
    %v323 = vld [vmem:[%s5] sm:$0xff]
    %v324 = vld [vmem:[%s5 + $0x8] sm:$0xff]
    %326 = vset.pattern.permute.xlu0 0
    %327 = vperm.xlu0 %326, %v323
    %v328 = vpop.permute.xlu0 %327
    %331 = vset.pattern.permute.xlu0 0
    %332 = vperm.xlu0 %331, %v324
    %v333 = vpop.permute.xlu0 %332
    %v335 = vmul.f32 %v321, %v328
    %v336 = vmul.f32 %v322, %v333
    %vm337 = vcmask 64512
    %v338 = vsel %vm337, %v335, 0.0
    %v339 = vsel %vm337, %v336, 0.0
    %v340 = vadd.f32 %v338, %v339
    %v341 = vrot.slane %v340, 4
    %v342 = vadd.f32 %v340, %v341
    %v343 = vrot.slane %v342, 2
    %v344 = vadd.f32 %v342, %v343
    %v345 = vrot.slane %v344, 1
    %v346 = vadd.f32 %v344, %v345
    %v347 = vmul.f32 %v167, %v287
    %v348 = vmul.f32 %v172, %v292
    %v349 = vmul.f32 %v177, %v297
    %v350 = vmul.f32 %v182, %v302
    %v351 = vsel %vm337, %v347, 0.0
    %v352 = vsel %vm337, %v348, 0.0
    %v353 = vadd.f32 %v351, %v352
    %v354 = vsel %vm337, %v349, 0.0
    %v355 = vadd.f32 %v353, %v354
    %v356 = vsel %vm337, %v350, 0.0
    %v357 = vadd.f32 %v355, %v356
    %v358 = vrot.slane %v357, 4
    %v359 = vadd.f32 %v357, %v358
    %v360 = vrot.slane %v359, 2
    %v361 = vadd.f32 %v359, %v360
    %v362 = vrot.slane %v361, 1
    %v363 = vadd.f32 %v361, %v362
    %v364 = vadd.f32 %v363, %v346
    %s365 = sld [smem:[#allocation2]]
    %v366 = vstv %s365
    %v367 = vadd.f32 %v364, %v366
    %vm368 = vcmask 57344
    %369 = vst.msk [vmem:[#allocation3] sm:$0x1] %vm368, %v367
    // Predicated region
    $region30: #{tpu_custom_call.1} parent=1 // pred_check
      _
    $region31: #{tpu_custom_call.1} parent=1 // pred_check_branch
      %371 = sbr.rel (0) target = $region33
    $region32: #{tpu_custom_call.1} parent=1 // pred_region
      %s373 = ssub.s32 16, 16
      %374 = vsyncadd [#allocation4], %s373
      %s376 = sshll.u32 [#allocation3], 4
      %s377 = int_to_ptr.vmem [resolvable:$true] %s376
      %379 = dma.vmem_to_hbm [thread:$0]  %s377, 16, %s7, [#allocation4]
    $region33: #{tpu_custom_call.1} parent=1 // pred_fallthru
      _
    // Predicated region
    $region34: #{tpu_custom_call.1} parent=1 // pred_check
      _
    $region35: #{tpu_custom_call.1} parent=1 // pred_check_branch
      %381 = sbr.rel (0) target = $region37
    $region36: #{tpu_custom_call.1} parent=1 // pred_region
      %382 = dma.done [#allocation4], 16
    $region37: #{tpu_custom_call.1} parent=1 // pred_fallthru
      _
    %383 = vsyncpa [#allocation4], 1

</llo_original>
